<compile_context>
chip_gen: v7x
topology: tpu7x:2x2x1
jax: 0.10.0
libtpu: 0.0.40
codegen_flags: <defaults>
</compile_context>

<pallas_src>
import jax
import jax.numpy as jnp
from functools import partial
from jax.experimental import pallas as pl
from jax.experimental.pallas import tpu as pltpu

T_REF = 15.0
T_0 = -46.02
_INV_DT = 1.0 / (T_REF - T_0)   # constant, folded at trace time
_LANES = 128


def _dense_decoders_kernel(z_phy_ref, z_aux_ref, t_air_ref, nee_ref, *, fold, dim_t):
    """Lane-dense path.

    t_air_ref / nee_ref : (TB, fold*dim_t)  -- fold consecutive batch rows
                          folded into the 128-lane axis (fold*dim_t == 128).
    z_phy_ref / z_aux_ref: (TB, fold)       -- one scalar per folded batch row.
    """
    t_air = t_air_ref[...]                                   # (TB, 128) f32
    # NOTE: undefined if T_air == T_0 (-46.02 C), same as the PyTorch module.
    term = _INV_DT - pl.reciprocal(t_air - T_0, approx=True)  # EUP vrcp

    if fold == 1:
        # dim_t is already a multiple of 128: natural (TB,1) lane broadcast.
        e0 = z_phy_ref[...]
        aux = z_aux_ref[...]
    else:
        # Expand (TB, fold) -> (TB, fold*dim_t) with a tiny MXU matmul against
        # a block-diagonal-of-ones selection matrix built from 2-D iotas
        # (MXU/XLU slots are free filler in this HBM-bound kernel).
        width = fold * dim_t
        lane = jax.lax.broadcasted_iota(jnp.int32, (fold, width), 1)
        row = jax.lax.broadcasted_iota(jnp.int32, (fold, width), 0)
        expand = ((lane >= row * dim_t) & (lane < (row + 1) * dim_t)).astype(jnp.float32)
        e0 = jnp.dot(z_phy_ref[...], expand, preferred_element_type=jnp.float32)
        aux = jnp.dot(z_aux_ref[...], expand, preferred_element_type=jnp.float32)

    # Arithmetic in f32 on every generation (v5e has no bf16 VPU/EUP); only
    # the final store casts if a narrower output dtype was requested.
    nee_ref[...] = (jnp.exp(e0 * term) * aux).astype(nee_ref.dtype)


def _narrow_decoders_kernel(z_phy_ref, z_aux_ref, t_air_ref, nee_ref):
    """Fallback path for shapes that cannot be lane-folded (e.g. B % fold != 0)."""
    t_air = t_air_ref[...]
    term = _INV_DT - pl.reciprocal(t_air - T_0, approx=True)
    nee_ref[...] = (jnp.exp(z_phy_ref[...] * term) * z_aux_ref[...]).astype(nee_ref.dtype)


def decoders_forward(z_phy, z_aux, t_air, param_x_lnvar, *,
                     block_rows=None, out_dtype=None):
    """Mirrors Decoders.forward -> (NEE, param_x_lnvar).

    z_phy, z_aux: (B, 1) float32;  t_air: (B, dim_t) float32.
    block_rows: optional batch-tile size (rows of the lane-dense layout).
    out_dtype: optionally jnp.bfloat16 to halve write traffic (default f32).
    """
    B, dim_t = t_air.shape
    assert z_phy.shape == (B, 1) and z_aux.shape == (B, 1), \
        "kernel assumes dim_z_phy == dim_z_aux == 1 (scalar E_0 / scale per sample)"
    out_dtype = out_dtype or t_air.dtype
    cparams = pltpu.CompilerParams(
        dimension_semantics=("parallel",),          # megacore on v7x, neutral on v5e/v6e
        vmem_limit_bytes=32 * 1024 * 1024,          # fits v7x (64 MiB phys) with headroom
    )

    fold = _LANES // dim_t if _LANES % dim_t == 0 else 0
    if fold >= 1 and B % fold == 0:
        # ---- lane-dense path (zero-copy reshapes; no HBM broadcast of z) ----
        width = fold * dim_t                         # == 128
        b_rows = B // fold
        tb = block_rows if block_rows is not None else min(b_rows, 4096)
        if tb != b_rows:
            tb = max(8, (tb // 8) * 8)               # keep sublane-aligned tiles
        grid = (pl.cdiv(b_rows, tb),)

        t_air_f = t_air.reshape(b_rows, width)       # zero-copy (row-major)
        z_phy_f = z_phy.reshape(b_rows, fold)
        z_aux_f = z_aux.reshape(b_rows, fold)

        nee_f = pl.pallas_call(
            partial(_dense_decoders_kernel, fold=fold, dim_t=dim_t),
            out_shape=jax.ShapeDtypeStruct((b_rows, width), out_dtype),
            grid_spec=pltpu.PrefetchScalarGridSpec(
                num_scalar_prefetch=0,
                grid=grid,
                in_specs=[
                    pl.BlockSpec((tb, fold), lambda i: (i, 0)),
                    pl.BlockSpec((tb, fold), lambda i: (i, 0)),
                    pl.BlockSpec((tb, width), lambda i: (i, 0)),
                ],
                out_specs=pl.BlockSpec((tb, width), lambda i: (i, 0)),
            ),
            compiler_params=cparams,
        )(z_phy_f, z_aux_f, t_air_f)
        nee = nee_f.reshape(B, dim_t)
    else:
        # ---- fallback: original (B, dim_t) layout, batch-tiled ----
        tb = B if B <= 1024 else 1024
        grid = (pl.cdiv(B, tb),)
        nee = pl.pallas_call(
            _narrow_decoders_kernel,
            out_shape=jax.ShapeDtypeStruct((B, dim_t), out_dtype),
            grid_spec=pltpu.PrefetchScalarGridSpec(
                num_scalar_prefetch=0,
                grid=grid,
                in_specs=[
                    pl.BlockSpec((tb, 1), lambda i: (i, 0)),
                    pl.BlockSpec((tb, 1), lambda i: (i, 0)),
                    pl.BlockSpec((tb, dim_t), lambda i: (i, 0)),
                ],
                out_specs=pl.BlockSpec((tb, dim_t), lambda i: (i, 0)),
            ),
            compiler_params=cparams,
        )(z_phy, z_aux, t_air)

    return nee, param_x_lnvar


def init_unused_params(config):
    """Parameters declared in Decoders.__init__ but unused in forward
    (func_phy Linear, func_aux MLP). Kept only for module parity."""
    key = jax.random.PRNGKey(42)
    params = {}
    k_phy, key = jax.random.split(key)
    params["func_phy"] = {
        "w": jax.random.normal(k_phy, (config["dim_z_phy"], 1), jnp.float32) * 0.1,
        "b": jnp.zeros((1,), jnp.float32),
    }
    if config["dim_z_aux"] > 0:
        dims = [config["dim_z_aux"] + 1] + config["hidlayers_aux_dec"] + [1]
        layers = []
        for d_in, d_out in zip(dims[:-1], dims[1:]):
            kw, key = jax.random.split(key)
            layers.append({
                "w": jax.random.normal(kw, (d_in, d_out), jnp.float32) * 0.1,
                "b": jnp.zeros((d_out,), jnp.float32),
            })
        params["func_aux"] = layers
    return params


if __name__ == "__main__":
    config = {
        "dim_z_phy": 1,
        "dim_z_aux": 1,
        "dim_t": 16,
        "activation": "relu",
        "hidlayers_aux_dec": [32],
        "x_lnvar": -2.0,
    }
    _ = init_unused_params(config)   # parity with __init__; not used in forward

    param_x_lnvar = jnp.ones((1,), jnp.float32) * config["x_lnvar"]

    def make_inputs(B, dim_t, key):
        k1, k2, k3 = jax.random.split(key, 3)
        z_phy = jax.random.uniform(k1, (B, 1), jnp.float32, 0.0, 2.0)
        z_aux = jax.random.normal(k2, (B, 1), jnp.float32)
        t_air = jax.random.uniform(k3, (B, dim_t), jnp.float32, -10.0, 30.0)
        return z_phy, z_aux, t_air

    def reference(z_phy, z_aux, t_air):   # exact-divide pure-JAX reference
        term = 1.0 / (T_REF - T_0) - 1.0 / (t_air - T_0)
        return jnp.exp(z_phy * term) * z_aux

    key = jax.random.PRNGKey(0)

    # Case 1: module toy shapes (B=2, dim_t=16) -> narrow fallback path.
    z1, a1, t1 = make_inputs(2, config["dim_t"], jax.random.fold_in(key, 1))
    nee1, lnvar1 = decoders_forward(z1, a1, t1, param_x_lnvar)
    jax.block_until_ready(nee1)
    assert nee1.shape == (2, config["dim_t"]) and lnvar1.shape == (1,)
    assert jnp.allclose(nee1, reference(z1, a1, t1), atol=1e-3, rtol=1e-3)

    # Case 2: lane-dense folded path, multi-step batch grid (block_rows=64 ->
    # grid=(4,)), parallel dimension semantics.
    z2, a2, t2 = make_inputs(2048, config["dim_t"], jax.random.fold_in(key, 2))
    nee2, lnvar2 = decoders_forward(z2, a2, t2, param_x_lnvar, block_rows=64)
    jax.block_until_ready(nee2)
    assert nee2.shape == (2048, config["dim_t"]) and lnvar2.shape == (1,)
    assert jnp.allclose(nee2, reference(z2, a2, t2), atol=1e-3, rtol=1e-3)

    print("KERNEL_OK")
</pallas_src>

<mosaic_0001>
module attributes {stable_mosaic.version = 11 : i64} {
  func.func @_narrow_decoders_kernel(%arg0: i32, %arg1: memref<2x1xf32, #tpu.memory_space<vmem>>, %arg2: memref<2x1xf32, #tpu.memory_space<vmem>>, %arg3: memref<2x16xf32, #tpu.memory_space<vmem>>, %arg4: memref<2x16xf32, #tpu.memory_space<vmem>>) attributes {dimension_semantics = [#tpu.dimension_semantics<parallel>], iteration_bounds = array<i64: 1>, scalar_prefetch = 0 : i64, scratch_operands = 0 : i64, tpu.core_type = #tpu.core_type<tc>, window_params = [{transform_indices = @transform_0, window_bounds = array<i64: 2, 1>}, {transform_indices = @transform_1, window_bounds = array<i64: 2, 1>}, {transform_indices = @transform_2, window_bounds = array<i64: 2, 16>}, {transform_indices = @transform_3, window_bounds = array<i64: 2, 16>}]} {
    %c0 = arith.constant 0 : index
    %c0_0 = arith.constant 0 : index
    %0 = vector.load %arg3[%c0, %c0_0] : memref<2x16xf32, #tpu.memory_space<vmem>>, vector<2x16xf32>
    %cst = arith.constant -4.602000e+01 : f32
    %1 = vector.broadcast %cst : f32 to vector<2x16xf32>
    %2 = arith.subf %0, %1 : vector<2x16xf32>
    %3 = tpu.reciprocal %2 {approx = true} : vector<2x16xf32> -> vector<2x16xf32>
    %cst_1 = arith.constant 0.0163880698 : f32
    %4 = vector.broadcast %cst_1 : f32 to vector<2x16xf32>
    %5 = arith.subf %4, %3 : vector<2x16xf32>
    %c0_2 = arith.constant 0 : index
    %c0_3 = arith.constant 0 : index
    %6 = vector.load %arg1[%c0_2, %c0_3] : memref<2x1xf32, #tpu.memory_space<vmem>>, vector<2x1xf32>
    %7 = vector.broadcast %6 : vector<2x1xf32> to vector<2x16xf32>
    %8 = arith.mulf %7, %5 : vector<2x16xf32>
    %9 = math.exp %8 : vector<2x16xf32>
    %c0_4 = arith.constant 0 : index
    %c0_5 = arith.constant 0 : index
    %10 = vector.load %arg2[%c0_4, %c0_5] : memref<2x1xf32, #tpu.memory_space<vmem>>, vector<2x1xf32>
    %11 = vector.broadcast %10 : vector<2x1xf32> to vector<2x16xf32>
    %12 = arith.mulf %9, %11 : vector<2x16xf32>
    %c0_6 = arith.constant 0 : index
    %c0_7 = arith.constant 0 : index
    %13 = vector.load %arg4[%c0_6, %c0_7] : memref<2x16xf32, #tpu.memory_space<vmem>>, vector<2x16xf32>
    tpu.vector_store %arg4[%c0_6, %c0_7], %12 {strides = array<i32>} : memref<2x16xf32, #tpu.memory_space<vmem>>, vector<2x16xf32>,
    return
  }
  func.func @transform_0(%arg0: i32) -> (i32, i32) {
    %c0_i32 = arith.constant 0 : i32
    %c0_i32_0 = arith.constant 0 : i32
    return %arg0, %c0_i32 : i32, i32
  }
  func.func @transform_1(%arg0: i32) -> (i32, i32) {
    %c0_i32 = arith.constant 0 : i32
    %c0_i32_0 = arith.constant 0 : i32
    return %arg0, %c0_i32 : i32, i32
  }
  func.func @transform_2(%arg0: i32) -> (i32, i32) {
    %c0_i32 = arith.constant 0 : i32
    %c0_i32_0 = arith.constant 0 : i32
    return %arg0, %c0_i32 : i32, i32
  }
  func.func @transform_3(%arg0: i32) -> (i32, i32) {
    %c0_i32 = arith.constant 0 : i32
    %c0_i32_0 = arith.constant 0 : i32
    return %arg0, %c0_i32 : i32, i32
  }
}

</mosaic_0001>

<llo_original>
// kernel: tpu_custom_call.1
$region0: #{tpu_custom_call.1}
  #allocation0 [shape = 'u32[]', space=smem, size = 0x4, offset = 0x4, fixed_abs, tag = 'smem constant byte address 0x4 - core index']
  #allocation1 [shape = 'u32[144,128]{1,0:T(1,128)}', space=vmem, size = 0x12000, scoped, tag = 'internal scratch']
  %s0 = inlined_call_operand.vmem [shape: f32[2,1], index: 0, kind: input, shape index: {}]
  %s1 = inlined_call_operand.vmem [shape: f32[2,1], index: 1, kind: input, shape index: {}]
  %s2 = inlined_call_operand.vmem [shape: f32[2,16], index: 2, kind: input, shape index: {}]
  %s3 = inlined_call_operand.hbm [shape: f32[2,16], index: 3, kind: output, shape index: {}]
  %s4 = sld [smem:[#allocation0]]
  $region22: #{tpu_custom_call.1} parent=0
    _
  %s6 = ssub.s32 1, %s4
  %s7 = scalar_select 0, %s6, %s4
  $region1: #{tpu_custom_call.1} parent=0
    #allocation2 [shape = 'u8[1024]{0}', space=vmem, size = 0x400, scoped, tag = 'output window, operand 0, single buffered']
    #allocation3 [shape = 's32[1]{0}', space=sflag, size = 0x4, scoped, tag = 'scoped memory for tpu_custom_call.1']
    %8 = vsyncpa [#allocation3], 0
    // Predicated region
    $region2: #{tpu_custom_call.1} parent=1 // pred_check
      _
    $region3: #{tpu_custom_call.1} parent=1 // pred_check_branch
      %10 = sbr.rel (0) target = $region5
    $region4: #{tpu_custom_call.1} parent=1 // pred_region
      _
    $region5: #{tpu_custom_call.1} parent=1 // pred_fallthru
      _
    // Predicated region
    $region6: #{tpu_custom_call.1} parent=1 // pred_check
      _
    $region7: #{tpu_custom_call.1} parent=1 // pred_check_branch
      %12 = sbr.rel (0) target = $region9
    $region8: #{tpu_custom_call.1} parent=1 // pred_region
      _
    $region9: #{tpu_custom_call.1} parent=1 // pred_fallthru
      _
    // Predicated region
    $region10: #{tpu_custom_call.1} parent=1 // pred_check
      _
    $region11: #{tpu_custom_call.1} parent=1 // pred_check_branch
      %14 = sbr.rel (0) target = $region13
    $region12: #{tpu_custom_call.1} parent=1 // pred_region
      _
    $region13: #{tpu_custom_call.1} parent=1 // pred_fallthru
      _
    %v15 = vld [vmem:[%s2] sm:$0x3]
    %v16 = vsub.f32 %v15, -46.02
    %v17 = vrcp.pop %v16
    %v18 = vsub.f32 0.01638807, %v17
    %v19 = vld [vmem:[%s0] sm:$0x3]
    %21 = vset.pattern.permute.xlu0 0
    %22 = vperm.xlu0 %21, %v19
    %v23 = vpop.permute.xlu0 %22
    %v25 = vmul.f32 %v23, %v18
    %v26 = vmul.f32 %v25, 1.442695
    %v27 = vpow.pop %v26
    %v28 = vld [vmem:[%s1] sm:$0x3]
    %30 = vset.pattern.permute.xlu0 0
    %31 = vperm.xlu0 %30, %v28
    %v32 = vpop.permute.xlu0 %31
    %v34 = vmul.f32 %v27, %v32
    %vm35 = vcmask 123904
    %36 = vst.msk [vmem:[#allocation2] sm:$0x3] %vm35, %v34
    // Predicated region
    $region14: #{tpu_custom_call.1} parent=1 // pred_check
      _
    $region15: #{tpu_custom_call.1} parent=1 // pred_check_branch
      %38 = sbr.rel (0) target = $region17
    $region16: #{tpu_custom_call.1} parent=1 // pred_region
      %s40 = ssub.s32 32, 32
      %41 = vsyncadd [#allocation3], %s40
      %s43 = sshll.u32 [#allocation2], 4
      %s44 = int_to_ptr.vmem [resolvable:$true] %s43
      %46 = dma.vmem_to_hbm [thread:$0]  %s44, 32, %s3, [#allocation3]
    $region17: #{tpu_custom_call.1} parent=1 // pred_fallthru
      _
    // Predicated region
    $region18: #{tpu_custom_call.1} parent=1 // pred_check
      _
    $region19: #{tpu_custom_call.1} parent=1 // pred_check_branch
      %48 = sbr.rel (0) target = $region21
    $region20: #{tpu_custom_call.1} parent=1 // pred_region
      %49 = dma.done [#allocation3], 32
    $region21: #{tpu_custom_call.1} parent=1 // pred_fallthru
      _
    %50 = vsyncpa [#allocation3], 1

</llo_original>
